<compile_context>
chip_gen: v6e
topology: v6e:2x2x1
jax: 0.10.0
libtpu: 0.0.40
codegen_flags: <defaults>
</compile_context>

<pallas_src>
import jax
import jax.numpy as jnp
from jax import lax
from jax.experimental import pallas as pl
from jax.experimental.pallas import tpu as pltpu


def _round_up(x, m):
    return ((x + m - 1) // m) * m


# -----------------------------------------------------------------------------
# Path 1: small table -> table resident in VMEM, one-hot MXU gather.
# -----------------------------------------------------------------------------
def _vmem_onehot_kernel(idx_ref, table_ref, out_ref):
    # idx_ref:   (tb, 1)         int32  VMEM
    # table_ref: (num_users, D)         VMEM (same block every step -> resident)
    # out_ref:   (tb, D)
    ids = idx_ref[...]                                          # (tb, 1)
    num_users = table_ref.shape[0]
    onehot = ids == lax.broadcasted_iota(jnp.int32, (ids.shape[0], num_users), 1)
    out_ref[...] = jnp.dot(
        onehot.astype(table_ref.dtype),
        table_ref[...],
        preferred_element_type=jnp.float32,
    ).astype(out_ref.dtype)


# -----------------------------------------------------------------------------
# Path 2: large table -> table stays in HBM, per-row DMA gather into out_ref.
# -----------------------------------------------------------------------------
def _hbm_gather_kernel(idx_ref, table_ref, out_ref, sem):
    # idx_ref:   (B_pad,)        int32  SMEM (scalar prefetch)
    # table_ref: (num_users, D)         HBM  (memory_space=pl.ANY, untiled)
    # out_ref:   (tb, D)                VMEM output block (DMA destination)
    # sem:       (1,)                   DMA semaphore shared by all row copies
    i = pl.program_id(0)
    tb = out_ref.shape[0]
    base = i * tb

    # Issue all row DMAs for this tile so they are in flight concurrently
    # (intra-step DMA parallelism hides HBM latency), then drain them all.
    # The double-buffered output block overlaps writeback of tile i with the
    # gather of tile i+1, so no extra cross-step scratch pipeline is needed.
    def issue(r, carry):
        row = idx_ref[base + r]
        pltpu.make_async_copy(table_ref.at[row], out_ref.at[r], sem.at[0]).start()
        return carry

    lax.fori_loop(0, tb, issue, 0, unroll=8)

    def drain(r, carry):
        # Rebuild the descriptor from the row actually copied so the byte
        # count always matches; all rows are the same size, so tb waits drain
        # exactly the tb completions signaled on the shared semaphore.
        row = idx_ref[base + r]
        pltpu.make_async_copy(table_ref.at[row], out_ref.at[r], sem.at[0]).wait()
        return carry

    lax.fori_loop(0, tb, drain, 0, unroll=8)


# -----------------------------------------------------------------------------
# Wrapper: Pallas equivalent of UserEmbeddings.forward(user_idx).
# -----------------------------------------------------------------------------
def user_embeddings(user_idx, table, *, tb=128, force_gather=False,
                    small_table_bytes=4 << 20):
    """user_idx: (B,) int indices; table: (num_users, D) embedding weight.

    Returns (B, D) gathered embeddings (== nn.Embedding(user_idx)).
    """
    B = user_idx.shape[0]
    num_users, D = table.shape
    itemsize = jnp.dtype(table.dtype).itemsize
    # Sublane tile depends on dtype packing (f32: 8, bf16: 16, int8/fp8: 32).
    sub = {4: 8, 2: 16, 1: 32}.get(itemsize, 8)

    idx = user_idx.astype(jnp.int32)

    # Batch tile: as large as requested (amortizes per-grid-step overhead,
    # keeps many row DMAs in flight), but never larger than the padded batch.
    # For v7x, callers with big batches should keep B_pad/tb >= ~8 so the
    # "parallel" grid axis can feed both TensorCores.
    tb_eff = max(sub, min(_round_up(tb, sub), _round_up(B, sub)))
    B_pad = _round_up(B, tb_eff)
    if B_pad != B:
        # Padded rows fetch row 0 (always valid) and are sliced off below.
        idx = jnp.concatenate([idx, jnp.zeros((B_pad - B,), jnp.int32)])

    # TODO(synk): out-of-range indices hit the DMA bounds check / produce a
    # wrong one-hot row rather than raising like nn.Embedding's IndexError.
    table_bytes = num_users * D * itemsize
    use_vmem_path = (not force_gather) and (2 * table_bytes <= small_table_bytes)

    if use_vmem_path:
        out = pl.pallas_call(
            _vmem_onehot_kernel,
            out_shape=jax.ShapeDtypeStruct((B_pad, D), table.dtype),
            grid=(B_pad // tb_eff,),
            in_specs=[
                pl.BlockSpec((tb_eff, 1), lambda i: (i, 0)),
                # Full-table block, constant index map -> loaded once, resident.
                pl.BlockSpec((num_users, D), lambda i: (0, 0)),
            ],
            out_specs=pl.BlockSpec((tb_eff, D), lambda i: (i, 0)),
            compiler_params=pltpu.CompilerParams(
                dimension_semantics=("parallel",)),
        )(idx.reshape(B_pad, 1), table)
    else:
        out = pl.pallas_call(
            _hbm_gather_kernel,
            out_shape=jax.ShapeDtypeStruct((B_pad, D), table.dtype),
            grid_spec=pltpu.PrefetchScalarGridSpec(
                num_scalar_prefetch=1,                  # idx -> SMEM
                grid=(B_pad // tb_eff,),
                in_specs=[
                    pl.BlockSpec(memory_space=pl.ANY),  # table stays in HBM
                ],
                # Last block dim == full D (legal even when D % 128 != 0).
                out_specs=pl.BlockSpec((tb_eff, D), lambda i, idx_ref: (i, 0)),
                scratch_shapes=[pltpu.SemaphoreType.DMA((1,))],
            ),
            compiler_params=pltpu.CompilerParams(
                dimension_semantics=("parallel",)),     # shard batch across TCs
        )(idx, table)

    return out[:B]


if __name__ == "__main__":
    # Small, module-consistent shapes.
    num_users = 64
    embedding_dim = 128
    batch = 16

    key = jax.random.PRNGKey(0)
    k_table, k_idx = jax.random.split(key)

    # nn.Embedding default init: weight ~ N(0, 1).
    table = jax.random.normal(k_table, (num_users, embedding_dim), dtype=jnp.float32)
    user_idx = jax.random.randint(k_idx, (batch,), 0, num_users, dtype=jnp.int32)

    ref = jnp.take(table, user_idx, axis=0)

    # Small-table fast path (table resident in VMEM, one-hot MXU gather).
    out_fast = jax.block_until_ready(user_embeddings(user_idx, table))
    assert out_fast.shape == (batch, embedding_dim)
    assert jnp.allclose(out_fast, ref, atol=1e-6), "fast path mismatch vs reference"

    # Large-table gather path (HBM table, per-row DMA straight into the output
    # block), forced here with tb=8 so the grid has 2 steps and the output
    # pipeline / DMA gather are exercised.
    out_gather = jax.block_until_ready(
        user_embeddings(user_idx, table, tb=8, force_gather=True))
    assert out_gather.shape == (batch, embedding_dim)
    assert jnp.allclose(out_gather, ref, atol=1e-6), "gather path mismatch vs reference"

    print("KERNEL_OK")
</pallas_src>

<mosaic_0001>
module attributes {stable_mosaic.version = 11 : i64} {
  func.func @_vmem_onehot_kernel(%arg0: i32, %arg1: memref<16x1xi32, #tpu.memory_space<vmem>>, %arg2: memref<64x128xf32, #tpu.memory_space<vmem>>, %arg3: memref<16x128xf32, #tpu.memory_space<vmem>>) attributes {dimension_semantics = [#tpu.dimension_semantics<parallel>], iteration_bounds = array<i64: 1>, scalar_prefetch = 0 : i64, scratch_operands = 0 : i64, tpu.core_type = #tpu.core_type<tc>, window_params = [{transform_indices = @transform_0, window_bounds = array<i64: 16, 1>}, {pipeline_mode = #tpu.pipeline_mode<synchronous>, transform_indices = @transform_1, window_bounds = array<i64: 64, 128>}, {transform_indices = @transform_2, window_bounds = array<i64: 16, 128>}]} {
    %c0 = arith.constant 0 : index
    %c0_0 = arith.constant 0 : index
    %0 = vector.load %arg1[%c0, %c0_0] : memref<16x1xi32, #tpu.memory_space<vmem>>, vector<16x1xi32>
    %1 = tpu.iota {dimensions = array<i32: 1>} : vector<16x64xi32>
    %2 = vector.broadcast %0 : vector<16x1xi32> to vector<16x64xi32>
    %3 = arith.cmpi eq, %2, %1 : vector<16x64xi32>
    %4 = arith.extui %3 : vector<16x64xi1> to vector<16x64xi32>
    %5 = arith.sitofp %4 : vector<16x64xi32> to vector<16x64xf32>
    %c0_1 = arith.constant 0 : index
    %c0_2 = arith.constant 0 : index
    %6 = vector.load %arg2[%c0_1, %c0_2] : memref<64x128xf32, #tpu.memory_space<vmem>>, vector<64x128xf32>
    %cst = arith.constant dense<0.000000e+00> : vector<16x128xf32>
    %7 = tpu.matmul %5, %6, %cst {dimension_numbers = #tpu.dot_dimension_numbers<[1], [0], [0], [1], [0, 0, 1, 1], [], []>} : vector<16x64xf32>, vector<64x128xf32>, vector<16x128xf32> -> vector<16x128xf32>
    %c0_3 = arith.constant 0 : index
    %c0_4 = arith.constant 0 : index
    %8 = vector.load %arg3[%c0_3, %c0_4] : memref<16x128xf32, #tpu.memory_space<vmem>>, vector<16x128xf32>
    tpu.vector_store %arg3[%c0_3, %c0_4], %7 {strides = array<i32>} : memref<16x128xf32, #tpu.memory_space<vmem>>, vector<16x128xf32>,
    return
  }
  func.func @transform_0(%arg0: i32) -> (i32, i32) {
    %c0_i32 = arith.constant 0 : i32
    %c0_i32_0 = arith.constant 0 : i32
    return %arg0, %c0_i32 : i32, i32
  }
  func.func @transform_1(%arg0: i32) -> (i32, i32) {
    %c0_i32 = arith.constant 0 : i32
    %c0_i32_0 = arith.constant 0 : i32
    %c0_i32_1 = arith.constant 0 : i32
    return %c0_i32, %c0_i32_0 : i32, i32
  }
  func.func @transform_2(%arg0: i32) -> (i32, i32) {
    %c0_i32 = arith.constant 0 : i32
    %c0_i32_0 = arith.constant 0 : i32
    return %arg0, %c0_i32 : i32, i32
  }
}

</mosaic_0001>

<llo_original>
// kernel: tpu_custom_call.1
$region0: #{tpu_custom_call.1}
  #allocation0 [shape = 'u32[]', space=smem, size = 0x4, offset = 0x4, fixed_abs, tag = 'smem constant byte address 0x4 - core index']
  #allocation1 [shape = 'u32[144,128]{1,0:T(1,128)}', space=vmem, size = 0x12000, scoped, tag = 'internal scratch']
  %s0 = inlined_call_operand.vmem [shape: s32[16,1], index: 0, kind: input, shape index: {}]
  %s1 = inlined_call_operand.hbm [shape: f32[64,128], index: 1, kind: input, shape index: {}]
  %s2 = inlined_call_operand.hbm [shape: f32[16,128], index: 2, kind: output, shape index: {}]
  %s3 = sld [smem:[#allocation0]]
  $region22: #{tpu_custom_call.1} parent=0
    _
  %s5 = ssub.s32 1, %s3
  %s6 = scalar_select 0, %s5, %s3
  $region1: #{tpu_custom_call.1} parent=0
    #allocation2 [shape = 'u8[32768]{0}', space=vmem, size = 0x8000, scoped, tag = 'input window, operand 1, single buffered']
    #allocation3 [shape = 's32[1]{0}', space=sflag, size = 0x4, scoped, tag = 'scoped memory for tpu_custom_call.1']
    #allocation4 [shape = 's32[1]{0}', space=sflag, size = 0x4, scoped, tag = 'scoped memory for tpu_custom_call.1']
    #allocation5 [shape = 'u8[8192]{0}', space=vmem, size = 0x2000, scoped, tag = 'output window, operand 0, single buffered']
    %7 = vsyncpa [#allocation3], 0
    %8 = vsyncpa [#allocation4], 0
    // Predicated region
    $region2: #{tpu_custom_call.1} parent=1 // pred_check
      _
    $region3: #{tpu_custom_call.1} parent=1 // pred_check_branch
      %10 = sbr.rel (0) target = $region5
    $region4: #{tpu_custom_call.1} parent=1 // pred_region
      _
    $region5: #{tpu_custom_call.1} parent=1 // pred_fallthru
      _
    // Predicated region
    $region6: #{tpu_custom_call.1} parent=1 // pred_check
      _
    $region7: #{tpu_custom_call.1} parent=1 // pred_check_branch
      %12 = sbr.rel (0) target = $region9
    $region8: #{tpu_custom_call.1} parent=1 // pred_region
      %s14 = ssub.s32 1024, 1024
      %15 = vsyncadd [#allocation3], %s14
      %s16 = sshll.u32 [#allocation2], 4
      %s17 = int_to_ptr.vmem [resolvable:$true] %s16
      %22 = dma.hbm_to_vmem [thread:$0]  %s1, 1024, %s17, [#allocation3], 128, 128, 8
    $region9: #{tpu_custom_call.1} parent=1 // pred_fallthru
      _
    // Predicated region
    $region10: #{tpu_custom_call.1} parent=1 // pred_check
      _
    $region11: #{tpu_custom_call.1} parent=1 // pred_check_branch
      %24 = sbr.rel (0) target = $region13
    $region12: #{tpu_custom_call.1} parent=1 // pred_region
      %25 = dma.done [#allocation3], 1024
    $region13: #{tpu_custom_call.1} parent=1 // pred_fallthru
      _
    %v26 = vld [vmem:[%s0] sm:$0xff]
    %v27 = vld [vmem:[%s0 + $0x8] sm:$0xff]
    %v28 = vlaneseq
    %v29 = vand.u32 %v28, 127
    %30 = vset.pattern.permute.xlu0 0
    %31 = vperm.xlu0 %30, %v26
    %v32 = vpop.permute.xlu0 %31
    %33 = vset.pattern.permute.xlu0 0
    %34 = vperm.xlu0 %33, %v27
    %v35 = vpop.permute.xlu0 %34
    %vm36 = vcmp.eq.s32.totalorder %v32, %v29
    %vm37 = vcmp.eq.s32.totalorder %v35, %v29
    %v38 = vsel %vm36, 1, 0
    %v39 = vsel %vm37, 1, 0
    %v40 = vcvt.s32.f32 %v38
    %v41 = vcvt.s32.f32 %v39
    %v42 = vld [vmem:[#allocation2] sm:$0xff]
    %v43 = vld [vmem:[#allocation2 + $0x8] sm:$0xff]
    %v44 = vld [vmem:[#allocation2 + $0x10] sm:$0xff]
    %v45 = vld [vmem:[#allocation2 + $0x18] sm:$0xff]
    %v46 = vld [vmem:[#allocation2 + $0x20] sm:$0xff]
    %v47 = vld [vmem:[#allocation2 + $0x28] sm:$0xff]
    %v48 = vld [vmem:[#allocation2 + $0x30] sm:$0xff]
    %v49 = vld [vmem:[#allocation2 + $0x38] sm:$0xff]
    %vm50 = vcmask 523264
    %v52 = vsel %vm50, %v40, 0
    %v55 = vsel %vm50, %v41, 0
    %57 = vmatprep.subr.mxu0 0.0
    %58 = vmatpush1.msra.mxu0 0.0
    %59 = vmatprep.subr.mxu0 0.0
    %60 = vmatpush1.msra.mxu0 0.0
    %61 = vmatprep.subr.mxu0 0.0
    %62 = vmatpush1.msra.mxu0 0.0
    %63 = vmatprep.subr.mxu0 0.0
    %64 = vmatpush1.msra.mxu0 0.0
    %65 = vmatprep.subr.mxu0 0.0
    %66 = vmatpush1.msra.mxu0 0.0
    %67 = vmatprep.subr.mxu0 0.0
    %68 = vmatpush1.msra.mxu0 0.0
    %69 = vmatprep.subr.mxu0 0.0
    %70 = vmatpush1.msra.mxu0 0.0
    %71 = vmatprep.subr.mxu0 0.0
    %72 = vmatpush1.msra.mxu0 0.0
    %73 = vmatprep.subr.mxu0 0.0
    %74 = vmatpush1.msra.mxu0 %v49
    %75 = vmatprep.subr.mxu0 0.0
    %76 = vmatpush1.msra.mxu0 %v48
    %77 = vmatprep.subr.mxu0 0.0
    %78 = vmatpush1.msra.mxu0 %v47
    %79 = vmatprep.subr.mxu0 0.0
    %80 = vmatpush1.msra.mxu0 %v46
    %81 = vmatprep.subr.mxu0 0.0
    %82 = vmatpush1.msra.mxu0 %v45
    %83 = vmatprep.subr.mxu0 0.0
    %84 = vmatpush1.msra.mxu0 %v44
    %85 = vmatprep.subr.mxu0 0.0
    %86 = vmatpush1.msra.mxu0 %v43
    %87 = vmatprep.subr.mxu0 0.0
    %88 = vmatpush1.msra.mxu0 %v42
    %89 = vmatprep.subr.mxu0 0.0
    %90 = vmatpush2.msra.mxu0 0.0
    %91 = vmatprep.subr.mxu0 0.0
    %92 = vmatpush2.msra.mxu0 0.0
    %93 = vmatprep.subr.mxu0 0.0
    %94 = vmatpush2.msra.mxu0 0.0
    %95 = vmatprep.subr.mxu0 0.0
    %96 = vmatpush2.msra.mxu0 0.0
    %97 = vmatprep.subr.mxu0 0.0
    %98 = vmatpush2.msra.mxu0 0.0
    %99 = vmatprep.subr.mxu0 0.0
    %100 = vmatpush2.msra.mxu0 0.0
    %101 = vmatprep.subr.mxu0 0.0
    %102 = vmatpush2.msra.mxu0 0.0
    %103 = vmatprep.subr.mxu0 0.0
    %104 = vmatpush2.msra.mxu0 0.0
    %105 = vmatprep.subr.mxu0 0.0
    %106 = vmatpush2.msra.mxu0 0.0
    %107 = vmatprep.subr.mxu0 0.0
    %108 = vmatpush2.msra.mxu0 0.0
    %109 = vmatprep.subr.mxu0 0.0
    %110 = vmatpush2.msra.mxu0 0.0
    %111 = vmatprep.subr.mxu0 0.0
    %112 = vmatpush2.msra.mxu0 0.0
    %113 = vmatprep.subr.mxu0 0.0
    %114 = vmatpush2.msra.mxu0 0.0
    %115 = vmatprep.subr.mxu0 0.0
    %116 = vmatpush2.msra.mxu0 0.0
    %117 = vmatprep.subr.mxu0 0.0
    %118 = vmatpush2.msra.mxu0 0.0
    %119 = vmatprep.subr.mxu0 0.0
    %120 = vmatpush2.msra.mxu0 0.0
    %121 = vmatprep.mubr.f32.mxu0 0.0
    %122 = vmatmul.mubr.f32.gmra.mxu0 %v52
    %v123 = vpop.f32.mrf.mxu0
    %v124 = vadd.f32 0.0, %v123
    %v125 = vpop.f32.mrf.mxu0
    %126 = vmatprep.mubr.f32.mxu0 0.0
    %127 = vmatmul.mubr.f32.gmra.mxu0 %v55
    %v128 = vpop.f32.mrf.mxu0
    %v129 = vadd.f32 0.0, %v128
    %v130 = vpop.f32.mrf.mxu0
    %131 = vdwg.mxu0
    %132 = vst [vmem:[#allocation5] sm:$0xff] %v124
    %133 = vst [vmem:[#allocation5 + $0x8] sm:$0xff] %v129
    // Predicated region
    $region14: #{tpu_custom_call.1} parent=1 // pred_check
      _
    $region15: #{tpu_custom_call.1} parent=1 // pred_check_branch
      %135 = sbr.rel (0) target = $region17
    $region16: #{tpu_custom_call.1} parent=1 // pred_region
      %s137 = ssub.s32 256, 256
      %138 = vsyncadd [#allocation4], %s137
      %s139 = sshll.u32 [#allocation5], 4
      %s140 = int_to_ptr.vmem [resolvable:$true] %s139
      %145 = dma.vmem_to_hbm [thread:$0]  %s140, 256, %s2, [#allocation4], 128, 128, 8
    $region17: #{tpu_custom_call.1} parent=1 // pred_fallthru
      _
    // Predicated region
    $region18: #{tpu_custom_call.1} parent=1 // pred_check
      _
    $region19: #{tpu_custom_call.1} parent=1 // pred_check_branch
      %147 = sbr.rel (0) target = $region21
    $region20: #{tpu_custom_call.1} parent=1 // pred_region
      %148 = dma.done [#allocation4], 256
    $region21: #{tpu_custom_call.1} parent=1 // pred_fallthru
      _
    %149 = vsyncpa [#allocation3], 1
    %150 = vsyncpa [#allocation4], 1

</llo_original>
